<compile_context>
chip_gen: v6e
topology: v6e:2x2x1
jax: 0.10.0
libtpu: 0.0.40
codegen_flags: <defaults>
</compile_context>

<pallas_src>
import functools
import math

import jax
import jax.numpy as jnp
from jax import lax
from jax.experimental import pallas as pl
from jax.experimental.pallas import tpu as pltpu

LANE = 128      # lane tile width
SUBLANE = 8     # f32 sublane tile height
# Explicit scoped-VMEM budget: huge headroom over the ~2 MiB/step actually used
# by the tiles below, while staying under v7x's 64 MiB physical VMEM.
VMEM_LIMIT_BYTES = 32 * 1024 * 1024


def _round_up(v, m):
    return (v + m - 1) // m * m


# ---------------------------------------------------------------------------
# One-time parameter transform (do this at model init, not per forward call).
# ---------------------------------------------------------------------------
def prepare_params(wq, bq, wk, bk, wv, bv):
    """Fuse/pad the three Linear layers into one MXU operand.

    wq/wk/wv: [D, D] PyTorch Linear layout ([out, in]); bq/bk/bv: [D].
    Returns w_qkv: [DPI, 3*DP] where
      * DPI = round_up(D + 1, 128): input features plus a bias row (matching
        the ones column appended to x), zero-padded to a lane multiple,
      * DP  = round_up(D, 128): each projection zero-padded to a full lane
        tile, so the Q/K/V column slices are lane-tile aligned,
      * the Q block (weights AND bias) is pre-scaled by 1/sqrt(D).
    """
    d = wq.shape[0]
    dp = _round_up(d, LANE)
    dpi = _round_up(d + 1, LANE)
    inv_scale = 1.0 / math.sqrt(float(d))

    def block(w, b, scale):
        wb = jnp.concatenate([w.T * scale, (b * scale)[None, :]], axis=0)  # [D+1, D]
        return jnp.pad(wb, ((0, dpi - (d + 1)), (0, dp - d)))              # [DPI, DP]

    return jnp.concatenate(
        [block(wq, bq, inv_scale), block(wk, bk, 1.0), block(wv, bv, 1.0)],
        axis=1)                                                            # [DPI, 3*DP]


# ---------------------------------------------------------------------------
# Kernel 1: fused Q|K|V projection (bias + 1/sqrt(D) already folded into W).
# ---------------------------------------------------------------------------
def _qkv_proj_kernel(x_ref, w_ref, qkv_ref, *, use_bf16):
    x = x_ref[...]
    w = w_ref[...]
    if use_bf16:
        x = x.astype(jnp.bfloat16)
        w = w.astype(jnp.bfloat16)
    qkv_ref[...] = jnp.dot(
        x, w, preferred_element_type=jnp.float32).astype(qkv_ref.dtype)


# ---------------------------------------------------------------------------
# Kernel 2: flash-style attention over (query tiles x kv tiles).
# ---------------------------------------------------------------------------
def _flash_attn_kernel(q_ref, k_ref, v_ref, o_ref, m_sc, l_sc, acc_sc,
                       *, block_k, n_valid, needs_mask):
    ki = pl.program_id(1)

    @pl.when(ki == 0)
    def _():
        m_sc[...] = jnp.full(m_sc.shape, -jnp.inf, dtype=jnp.float32)
        l_sc[...] = jnp.zeros(l_sc.shape, dtype=jnp.float32)
        acc_sc[...] = jnp.zeros(acc_sc.shape, dtype=jnp.float32)

    # scores = Q_tile @ K_tile^T without an explicit transpose: contract last
    # dims.  f32 accumulation on the MXU regardless of operand dtype.
    s = lax.dot_general(q_ref[...], k_ref[...],
                        dimension_numbers=(((1,), (1,)), ((), ())),
                        preferred_element_type=jnp.float32)

    if needs_mask:
        # Zero-padded key rows (index >= n_valid) must get no softmax weight.
        key_idx = ki * block_k + lax.broadcasted_iota(jnp.int32, s.shape, 1)
        s = jnp.where(key_idx < n_valid, s, -jnp.inf)

    # Online (numerically stable) softmax accumulation, all in f32.
    m_prev = m_sc[...]
    m_new = jnp.maximum(m_prev, jnp.max(s, axis=-1, keepdims=True))
    alpha = jnp.exp(m_prev - m_new)
    p = jnp.exp(s - m_new)
    l_sc[...] = alpha * l_sc[...] + jnp.sum(p, axis=-1, keepdims=True)
    acc_sc[...] = alpha * acc_sc[...] + jnp.dot(
        p.astype(v_ref.dtype), v_ref[...], preferred_element_type=jnp.float32)
    m_sc[...] = m_new

    @pl.when(ki == pl.num_programs(1) - 1)
    def _():
        # Exact normalization (no approx reciprocal -- correctness fix).
        o_ref[...] = (acc_sc[...] / l_sc[...]).astype(o_ref.dtype)


# ---------------------------------------------------------------------------
# Wrapper.
# ---------------------------------------------------------------------------
def simple_self_attention(x, w_qkv, *, block_size=256, use_bf16_matmul=False,
                          trim_output=True):
    """Forward pass of SimpleSelfAttention.  x: [N, D] f32; w_qkv from prepare_params."""
    n, d = x.shape
    dpi, three_dp = w_qkv.shape
    dp = three_dp // 3

    # Tile size: >=256 keeps the 256-wide MXU on v6e/v7x busy at large N;
    # auto-shrinks (sublane-rounded) for small inputs like the demo.
    blk = min(_round_up(block_size, SUBLANE), _round_up(n, SUBLANE))
    n_pad = _round_up(n, blk)
    num_tiles = n_pad // blk
    needs_mask = n_pad != n

    # Lane-dense x with a ones column (bias folding) inside the lane padding.
    x_aug = jnp.concatenate([x, jnp.ones((n, 1), x.dtype)], axis=1)   # [N, D+1]
    x_pad = jnp.pad(x_aug, ((0, n_pad - n), (0, dpi - (d + 1))))      # [N_pad, DPI]

    qkv_dtype = jnp.bfloat16 if use_bf16_matmul else jnp.float32

    # ---- fused Q|K|V projection -------------------------------------------
    qkv = pl.pallas_call(
        functools.partial(_qkv_proj_kernel, use_bf16=use_bf16_matmul),
        out_shape=jax.ShapeDtypeStruct((n_pad, 3 * dp), qkv_dtype),
        grid=(num_tiles,),
        in_specs=[pl.BlockSpec((blk, dpi), lambda i: (i, 0)),
                  pl.BlockSpec((dpi, 3 * dp), lambda i: (0, 0))],
        out_specs=pl.BlockSpec((blk, 3 * dp), lambda i: (i, 0)),
        compiler_params=pltpu.CompilerParams(
            dimension_semantics=("parallel",),
            vmem_limit_bytes=VMEM_LIMIT_BYTES),
    )(x_pad, w_qkv)

    # ---- flash attention ----------------------------------------------------
    kernel = functools.partial(_flash_attn_kernel, block_k=blk, n_valid=n,
                               needs_mask=needs_mask)
    flops = 2 * n_pad * n_pad * dp * 2                       # QK^T + PV
    bytes_accessed = int(qkv.dtype.itemsize * n_pad * dp * (1 + 2 * num_tiles)
                         + 4 * n_pad * dp)
    cost = pl.CostEstimate(flops=flops,
                           transcendentals=n_pad * n_pad + n_pad * num_tiles,
                           bytes_accessed=bytes_accessed)

    out_pad = pl.pallas_call(
        kernel,
        out_shape=jax.ShapeDtypeStruct((n_pad, dp), jnp.float32),
        grid=(num_tiles, num_tiles),
        # Same qkv array passed three times with lane-tile-aligned column blocks.
        in_specs=[pl.BlockSpec((blk, dp), lambda qi, ki: (qi, 0)),   # Q columns
                  pl.BlockSpec((blk, dp), lambda qi, ki: (ki, 1)),   # K columns
                  pl.BlockSpec((blk, dp), lambda qi, ki: (ki, 2))],  # V columns
        out_specs=pl.BlockSpec((blk, dp), lambda qi, ki: (qi, 0)),
        scratch_shapes=[pltpu.VMEM((blk, 1), jnp.float32),    # running max
                        pltpu.VMEM((blk, 1), jnp.float32),    # running denom
                        pltpu.VMEM((blk, dp), jnp.float32)],  # output accumulator
        compiler_params=pltpu.CompilerParams(
            dimension_semantics=("parallel", "arbitrary"),
            vmem_limit_bytes=VMEM_LIMIT_BYTES),
        cost_estimate=cost,
    )(qkv, qkv, qkv)

    if trim_output:
        # Semantic parity with the module ([N, D]).  Consumers that can read
        # the lane-dense padded layout should pass trim_output=False to skip
        # this extra XLA copy.
        return out_pad[:n, :d]
    return out_pad


# ---------------------------------------------------------------------------
# Pure-JAX reference (mirrors the PyTorch module).
# ---------------------------------------------------------------------------
def _reference(x, wq, bq, wk, bk, wv, bv):
    d = x.shape[-1]
    q = x @ wq.T + bq
    k = x @ wk.T + bk
    v = x @ wv.T + bv
    scores = (q @ k.T) / jnp.sqrt(jnp.float32(d))
    attn = jax.nn.softmax(scores, axis=-1)
    return attn @ v


if __name__ == "__main__":
    N, D = 8, 32  # seq length, feature_dim

    key = jax.random.PRNGKey(0)
    kx, kq, kbq, kk, kbk, kv, kbv, kx2 = jax.random.split(key, 8)

    # Deterministic parameter init (PyTorch-Linear-style uniform +/- 1/sqrt(D)).
    bound = 1.0 / math.sqrt(D)
    x = jax.random.normal(kx, (N, D), dtype=jnp.float32)
    wq = jax.random.uniform(kq, (D, D), minval=-bound, maxval=bound, dtype=jnp.float32)
    bq = jax.random.uniform(kbq, (D,), minval=-bound, maxval=bound, dtype=jnp.float32)
    wk = jax.random.uniform(kk, (D, D), minval=-bound, maxval=bound, dtype=jnp.float32)
    bk = jax.random.uniform(kbk, (D,), minval=-bound, maxval=bound, dtype=jnp.float32)
    wv = jax.random.uniform(kv, (D, D), minval=-bound, maxval=bound, dtype=jnp.float32)
    bv = jax.random.uniform(kbv, (D,), minval=-bound, maxval=bound, dtype=jnp.float32)

    # One-time parameter fusion / transposition / scaling / padding.
    w_qkv = prepare_params(wq, bq, wk, bk, wv, bv)

    # --- main check: single-tile path (grid (1,1)), exact f32 math ----------
    out = simple_self_attention(x, w_qkv)
    out = jax.block_until_ready(out)
    ref = _reference(x, wq, bq, wk, bk, wv, bv)
    assert out.shape == (N, D)
    assert jnp.allclose(out, ref, atol=5e-4, rtol=5e-4), "mismatch vs reference"

    # --- second check: multi-tile flash path with padded-key masking --------
    N2 = 20
    x2 = jax.random.normal(kx2, (N2, D), dtype=jnp.float32)
    out2 = simple_self_attention(x2, w_qkv, block_size=8)   # grid (3,3), 4 masked keys
    out2 = jax.block_until_ready(out2)
    ref2 = _reference(x2, wq, bq, wk, bk, wv, bv)
    assert out2.shape == (N2, D)
    assert jnp.allclose(out2, ref2, atol=5e-4, rtol=5e-4), "mismatch vs reference (tiled)"

    print("KERNEL_OK")
</pallas_src>

<mosaic_0001>
module attributes {stable_mosaic.version = 11 : i64} {
  func.func @_qkv_proj_kernel(%arg0: i32, %arg1: memref<8x128xf32, #tpu.memory_space<vmem>>, %arg2: memref<128x384xf32, #tpu.memory_space<vmem>>, %arg3: memref<8x384xf32, #tpu.memory_space<vmem>>) attributes {dimension_semantics = [#tpu.dimension_semantics<parallel>], iteration_bounds = array<i64: 1>, scalar_prefetch = 0 : i64, scratch_operands = 0 : i64, tpu.core_type = #tpu.core_type<tc>, window_params = [{transform_indices = @transform_0, window_bounds = array<i64: 8, 128>}, {pipeline_mode = #tpu.pipeline_mode<synchronous>, transform_indices = @transform_1, window_bounds = array<i64: 128, 384>}, {transform_indices = @transform_2, window_bounds = array<i64: 8, 384>}]} {
    %c0 = arith.constant 0 : index
    %c0_0 = arith.constant 0 : index
    %0 = vector.load %arg1[%c0, %c0_0] : memref<8x128xf32, #tpu.memory_space<vmem>>, vector<8x128xf32>
    %c0_1 = arith.constant 0 : index
    %c0_2 = arith.constant 0 : index
    %1 = vector.load %arg2[%c0_1, %c0_2] : memref<128x384xf32, #tpu.memory_space<vmem>>, vector<128x384xf32>
    %cst = arith.constant dense<0.000000e+00> : vector<8x384xf32>
    %2 = tpu.matmul %0, %1, %cst {dimension_numbers = #tpu.dot_dimension_numbers<[1], [0], [0], [1], [0, 0, 1, 1], [], []>} : vector<8x128xf32>, vector<128x384xf32>, vector<8x384xf32> -> vector<8x384xf32>
    %c0_3 = arith.constant 0 : index
    %c0_4 = arith.constant 0 : index
    %3 = vector.load %arg3[%c0_3, %c0_4] : memref<8x384xf32, #tpu.memory_space<vmem>>, vector<8x384xf32>
    tpu.vector_store %arg3[%c0_3, %c0_4], %2 {strides = array<i32>} : memref<8x384xf32, #tpu.memory_space<vmem>>, vector<8x384xf32>,
    return
  }
  func.func @transform_0(%arg0: i32) -> (i32, i32) {
    %c0_i32 = arith.constant 0 : i32
    %c0_i32_0 = arith.constant 0 : i32
    return %arg0, %c0_i32 : i32, i32
  }
  func.func @transform_1(%arg0: i32) -> (i32, i32) {
    %c0_i32 = arith.constant 0 : i32
    %c0_i32_0 = arith.constant 0 : i32
    %c0_i32_1 = arith.constant 0 : i32
    return %c0_i32, %c0_i32_0 : i32, i32
  }
  func.func @transform_2(%arg0: i32) -> (i32, i32) {
    %c0_i32 = arith.constant 0 : i32
    %c0_i32_0 = arith.constant 0 : i32
    return %arg0, %c0_i32 : i32, i32
  }
}

</mosaic_0001>

<llo_original>
// kernel: tpu_custom_call.1
$region0: #{tpu_custom_call.1}
  #allocation0 [shape = 'u32[]', space=smem, size = 0x4, offset = 0x4, fixed_abs, tag = 'smem constant byte address 0x4 - core index']
  #allocation1 [shape = 'u32[144,128]{1,0:T(1,128)}', space=vmem, size = 0x12000, scoped, tag = 'internal scratch']
  %s0 = inlined_call_operand.hbm [shape: f32[8,128], index: 0, kind: input, shape index: {}]
  %s1 = inlined_call_operand.hbm [shape: f32[128,384], index: 1, kind: input, shape index: {}]
  %s2 = inlined_call_operand.hbm [shape: f32[8,384], index: 2, kind: output, shape index: {}]
  %s3 = sld [smem:[#allocation0]]
  $region26: #{tpu_custom_call.1} parent=0
    _
  %s5 = ssub.s32 1, %s3
  %s6 = scalar_select 0, %s5, %s3
  $region1: #{tpu_custom_call.1} parent=0
    #allocation2 [shape = 'u8[4096]{0}', space=vmem, size = 0x1000, scoped, tag = 'input window, operand 0, single buffered']
    #allocation3 [shape = 's32[1]{0}', space=sflag, size = 0x4, scoped, tag = 'scoped memory for tpu_custom_call.1']
    #allocation4 [shape = 's32[1]{0}', space=sflag, size = 0x4, scoped, tag = 'scoped memory for tpu_custom_call.1']
    #allocation5 [shape = 'u8[196608]{0}', space=vmem, size = 0x30000, scoped, tag = 'input window, operand 1, single buffered']
    #allocation6 [shape = 's32[1]{0}', space=sflag, size = 0x4, scoped, tag = 'scoped memory for tpu_custom_call.1']
    #allocation7 [shape = 'u8[12288]{0}', space=vmem, size = 0x3000, scoped, tag = 'output window, operand 0, single buffered']
    %7 = vsyncpa [#allocation3], 0
    %8 = vsyncpa [#allocation6], 0
    %9 = vsyncpa [#allocation4], 0
    // Predicated region
    $region2: #{tpu_custom_call.1} parent=1 // pred_check
      _
    $region3: #{tpu_custom_call.1} parent=1 // pred_check_branch
      %11 = sbr.rel (0) target = $region5
    $region4: #{tpu_custom_call.1} parent=1 // pred_region
      %s13 = ssub.s32 128, 128
      %14 = vsyncadd [#allocation3], %s13
      %s16 = sshll.u32 [#allocation2], 4
      %s17 = int_to_ptr.vmem [resolvable:$true] %s16
      %19 = dma.hbm_to_vmem [thread:$0]  %s0, 128, %s17, [#allocation3]
    $region5: #{tpu_custom_call.1} parent=1 // pred_fallthru
      _
    // Predicated region
    $region6: #{tpu_custom_call.1} parent=1 // pred_check
      _
    $region7: #{tpu_custom_call.1} parent=1 // pred_check_branch
      %21 = sbr.rel (0) target = $region9
    $region8: #{tpu_custom_call.1} parent=1 // pred_region
      %s23 = ssub.s32 6144, 6144
      %24 = vsyncadd [#allocation6], %s23
      %s25 = sshll.u32 [#allocation5], 4
      %s26 = int_to_ptr.vmem [resolvable:$true] %s25
      %31 = dma.hbm_to_vmem [thread:$0]  %s1, 6144, %s26, [#allocation6], 384, 384, 24
    $region9: #{tpu_custom_call.1} parent=1 // pred_fallthru
      _
    // Predicated region
    $region10: #{tpu_custom_call.1} parent=1 // pred_check
      _
    $region11: #{tpu_custom_call.1} parent=1 // pred_check_branch
      %33 = sbr.rel (0) target = $region13
    $region12: #{tpu_custom_call.1} parent=1 // pred_region
      %34 = dma.done [#allocation3], 128
    $region13: #{tpu_custom_call.1} parent=1 // pred_fallthru
      _
    // Predicated region
    $region14: #{tpu_custom_call.1} parent=1 // pred_check
      _
    $region15: #{tpu_custom_call.1} parent=1 // pred_check_branch
      %36 = sbr.rel (0) target = $region17
    $region16: #{tpu_custom_call.1} parent=1 // pred_region
      %37 = dma.done [#allocation6], 6144
    $region17: #{tpu_custom_call.1} parent=1 // pred_fallthru
      _
    %v38 = vld [vmem:[#allocation2] sm:$0xff]
    %v39 = vld [vmem:[#allocation5] sm:$0xff]
    %v40 = vld [vmem:[#allocation5 + $0x8] sm:$0xff]
    %v41 = vld [vmem:[#allocation5 + $0x10] sm:$0xff]
    %v42 = vld [vmem:[#allocation5 + $0x18] sm:$0xff]
    %v43 = vld [vmem:[#allocation5 + $0x20] sm:$0xff]
    %v44 = vld [vmem:[#allocation5 + $0x28] sm:$0xff]
    %v45 = vld [vmem:[#allocation5 + $0x30] sm:$0xff]
    %v46 = vld [vmem:[#allocation5 + $0x38] sm:$0xff]
    %v47 = vld [vmem:[#allocation5 + $0x40] sm:$0xff]
    %v48 = vld [vmem:[#allocation5 + $0x48] sm:$0xff]
    %v49 = vld [vmem:[#allocation5 + $0x50] sm:$0xff]
    %v50 = vld [vmem:[#allocation5 + $0x58] sm:$0xff]
    %v51 = vld [vmem:[#allocation5 + $0x60] sm:$0xff]
    %v52 = vld [vmem:[#allocation5 + $0x68] sm:$0xff]
    %v53 = vld [vmem:[#allocation5 + $0x70] sm:$0xff]
    %v54 = vld [vmem:[#allocation5 + $0x78] sm:$0xff]
    %v55 = vld [vmem:[#allocation5 + $0x80] sm:$0xff]
    %v56 = vld [vmem:[#allocation5 + $0x88] sm:$0xff]
    %v57 = vld [vmem:[#allocation5 + $0x90] sm:$0xff]
    %v58 = vld [vmem:[#allocation5 + $0x98] sm:$0xff]
    %v59 = vld [vmem:[#allocation5 + $0xa0] sm:$0xff]
    %v60 = vld [vmem:[#allocation5 + $0xa8] sm:$0xff]
    %v61 = vld [vmem:[#allocation5 + $0xb0] sm:$0xff]
    %v62 = vld [vmem:[#allocation5 + $0xb8] sm:$0xff]
    %v63 = vld [vmem:[#allocation5 + $0xc0] sm:$0xff]
    %v64 = vld [vmem:[#allocation5 + $0xc8] sm:$0xff]
    %v65 = vld [vmem:[#allocation5 + $0xd0] sm:$0xff]
    %v66 = vld [vmem:[#allocation5 + $0xd8] sm:$0xff]
    %v67 = vld [vmem:[#allocation5 + $0xe0] sm:$0xff]
    %v68 = vld [vmem:[#allocation5 + $0xe8] sm:$0xff]
    %v69 = vld [vmem:[#allocation5 + $0xf0] sm:$0xff]
    %v70 = vld [vmem:[#allocation5 + $0xf8] sm:$0xff]
    %v71 = vld [vmem:[#allocation5 + $0x100] sm:$0xff]
    %v72 = vld [vmem:[#allocation5 + $0x108] sm:$0xff]
    %v73 = vld [vmem:[#allocation5 + $0x110] sm:$0xff]
    %v74 = vld [vmem:[#allocation5 + $0x118] sm:$0xff]
    %v75 = vld [vmem:[#allocation5 + $0x120] sm:$0xff]
    %v76 = vld [vmem:[#allocation5 + $0x128] sm:$0xff]
    %v77 = vld [vmem:[#allocation5 + $0x130] sm:$0xff]
    %v78 = vld [vmem:[#allocation5 + $0x138] sm:$0xff]
    %v79 = vld [vmem:[#allocation5 + $0x140] sm:$0xff]
    %v80 = vld [vmem:[#allocation5 + $0x148] sm:$0xff]
    %v81 = vld [vmem:[#allocation5 + $0x150] sm:$0xff]
    %v82 = vld [vmem:[#allocation5 + $0x158] sm:$0xff]
    %v83 = vld [vmem:[#allocation5 + $0x160] sm:$0xff]
    %v84 = vld [vmem:[#allocation5 + $0x168] sm:$0xff]
    %v85 = vld [vmem:[#allocation5 + $0x170] sm:$0xff]
    %v86 = vld [vmem:[#allocation5 + $0x178] sm:$0xff]
    %87 = vmatprep.subr.mxu0 %v85
    %88 = vmatpush1.msra.mxu0 %v84
    %89 = vmatprep.subr.mxu0 %v82
    %90 = vmatpush1.msra.mxu0 %v81
    %91 = vmatprep.subr.mxu0 %v79
    %92 = vmatpush1.msra.mxu0 %v78
    %93 = vmatprep.subr.mxu0 %v76
    %94 = vmatpush1.msra.mxu0 %v75
    %95 = vmatprep.subr.mxu0 %v73
    %96 = vmatpush1.msra.mxu0 %v72
    %97 = vmatprep.subr.mxu0 %v70
    %98 = vmatpush1.msra.mxu0 %v69
    %99 = vmatprep.subr.mxu0 %v67
    %100 = vmatpush1.msra.mxu0 %v66
    %101 = vmatprep.subr.mxu0 %v64
    %102 = vmatpush1.msra.mxu0 %v63
    %103 = vmatprep.subr.mxu0 %v61
    %104 = vmatpush1.msra.mxu0 %v60
    %105 = vmatprep.subr.mxu0 %v58
    %106 = vmatpush1.msra.mxu0 %v57
    %107 = vmatprep.subr.mxu0 %v55
    %108 = vmatpush1.msra.mxu0 %v54
    %109 = vmatprep.subr.mxu0 %v52
    %110 = vmatpush1.msra.mxu0 %v51
    %111 = vmatprep.subr.mxu0 %v49
    %112 = vmatpush1.msra.mxu0 %v48
    %113 = vmatprep.subr.mxu0 %v46
    %114 = vmatpush1.msra.mxu0 %v45
    %115 = vmatprep.subr.mxu0 %v43
    %116 = vmatpush1.msra.mxu0 %v42
    %117 = vmatprep.subr.mxu0 %v40
    %118 = vmatpush1.msra.mxu0 %v39
    %119 = vmatprep.subr.mxu0 0.0
    %120 = vmatpush2.msra.mxu0 0.0
    %121 = vmatprep.subr.mxu0 0.0
    %122 = vmatpush2.msra.mxu0 0.0
    %123 = vmatprep.subr.mxu0 0.0
    %124 = vmatpush2.msra.mxu0 0.0
    %125 = vmatprep.subr.mxu0 0.0
    %126 = vmatpush2.msra.mxu0 0.0
    %127 = vmatprep.subr.mxu0 0.0
    %128 = vmatpush2.msra.mxu0 0.0
    %129 = vmatprep.subr.mxu0 0.0
    %130 = vmatpush2.msra.mxu0 0.0
    %131 = vmatprep.subr.mxu0 0.0
    %132 = vmatpush2.msra.mxu0 0.0
    %133 = vmatprep.subr.mxu0 0.0
    %134 = vmatpush2.msra.mxu0 0.0
    %135 = vmatprep.subr.mxu0 0.0
    %136 = vmatpush2.msra.mxu0 0.0
    %137 = vmatprep.subr.mxu0 0.0
    %138 = vmatpush2.msra.mxu0 0.0
    %139 = vmatprep.subr.mxu0 0.0
    %140 = vmatpush2.msra.mxu0 0.0
    %141 = vmatprep.subr.mxu0 0.0
    %142 = vmatpush2.msra.mxu0 0.0
    %143 = vmatprep.subr.mxu0 0.0
    %144 = vmatpush2.msra.mxu0 0.0
    %145 = vmatprep.subr.mxu0 0.0
    %146 = vmatpush2.msra.mxu0 0.0
    %147 = vmatprep.subr.mxu0 0.0
    %148 = vmatpush2.msra.mxu0 0.0
    %149 = vmatprep.subr.mxu0 0.0
    %150 = vmatpush2.msra.mxu0 0.0
    %151 = vmatprep.mubr.f32.mxu0 0.0
    %152 = vmatmul.mubr.f32.gmra.mxu0 %v38
    %v153 = vpop.f32.mrf.mxu0
    %v154 = vadd.f32 0.0, %v153
    %v155 = vpop.f32.mrf.mxu0
    %v156 = vadd.f32 0.0, %v155
    %157 = vdwg.mxu0
    %158 = vmatprep.subr.mxu0 0.0
    %159 = vmatpush1.msra.mxu0 %v86
    %160 = vmatprep.subr.mxu0 0.0
    %161 = vmatpush1.msra.mxu0 %v83
    %162 = vmatprep.subr.mxu0 0.0
    %163 = vmatpush1.msra.mxu0 %v80
    %164 = vmatprep.subr.mxu0 0.0
    %165 = vmatpush1.msra.mxu0 %v77
    %166 = vmatprep.subr.mxu0 0.0
    %167 = vmatpush1.msra.mxu0 %v74
    %168 = vmatprep.subr.mxu0 0.0
    %169 = vmatpush1.msra.mxu0 %v71
    %170 = vmatprep.subr.mxu0 0.0
    %171 = vmatpush1.msra.mxu0 %v68
    %172 = vmatprep.subr.mxu0 0.0
    %173 = vmatpush1.msra.mxu0 %v65
    %174 = vmatprep.subr.mxu0 0.0
    %175 = vmatpush1.msra.mxu0 %v62
    %176 = vmatprep.subr.mxu0 0.0
    %177 = vmatpush1.msra.mxu0 %v59
    %178 = vmatprep.subr.mxu0 0.0
    %179 = vmatpush1.msra.mxu0 %v56
    %180 = vmatprep.subr.mxu0 0.0
    %181 = vmatpush1.msra.mxu0 %v53
    %182 = vmatprep.subr.mxu0 0.0
    %183 = vmatpush1.msra.mxu0 %v50
    %184 = vmatprep.subr.mxu0 0.0
    %185 = vmatpush1.msra.mxu0 %v47
    %186 = vmatprep.subr.mxu0 0.0
    %187 = vmatpush1.msra.mxu0 %v44
    %188 = vmatprep.subr.mxu0 0.0
    %189 = vmatpush1.msra.mxu0 %v41
    %190 = vmatprep.subr.mxu0 0.0
    %191 = vmatpush2.msra.mxu0 0.0
    %192 = vmatprep.subr.mxu0 0.0
    %193 = vmatpush2.msra.mxu0 0.0
    %194 = vmatprep.subr.mxu0 0.0
    %195 = vmatpush2.msra.mxu0 0.0
    %196 = vmatprep.subr.mxu0 0.0
    %197 = vmatpush2.msra.mxu0 0.0
    %198 = vmatprep.subr.mxu0 0.0
    %199 = vmatpush2.msra.mxu0 0.0
    %200 = vmatprep.subr.mxu0 0.0
    %201 = vmatpush2.msra.mxu0 0.0
    %202 = vmatprep.subr.mxu0 0.0
    %203 = vmatpush2.msra.mxu0 0.0
    %204 = vmatprep.subr.mxu0 0.0
    %205 = vmatpush2.msra.mxu0 0.0
    %206 = vmatprep.subr.mxu0 0.0
    %207 = vmatpush2.msra.mxu0 0.0
    %208 = vmatprep.subr.mxu0 0.0
    %209 = vmatpush2.msra.mxu0 0.0
    %210 = vmatprep.subr.mxu0 0.0
    %211 = vmatpush2.msra.mxu0 0.0
    %212 = vmatprep.subr.mxu0 0.0
    %213 = vmatpush2.msra.mxu0 0.0
    %214 = vmatprep.subr.mxu0 0.0
    %215 = vmatpush2.msra.mxu0 0.0
    %216 = vmatprep.subr.mxu0 0.0
    %217 = vmatpush2.msra.mxu0 0.0
    %218 = vmatprep.subr.mxu0 0.0
    %219 = vmatpush2.msra.mxu0 0.0
    %220 = vmatprep.subr.mxu0 0.0
    %221 = vmatpush2.msra.mxu0 0.0
    %222 = vmatprep.mubr.f32.mxu0 0.0
    %223 = vmatmul.mubr.f32.gmra.mxu0 %v38
    %v224 = vpop.f32.mrf.mxu0
    %v225 = vadd.f32 0.0, %v224
    %v226 = vpop.f32.mrf.mxu0
    %227 = vdwg.mxu0
    %228 = vst [vmem:[#allocation7] sm:$0xff] %v154
    %229 = vst [vmem:[#allocation7 + $0x8] sm:$0xff] %v156
    %230 = vst [vmem:[#allocation7 + $0x10] sm:$0xff] %v225
    // Predicated region
    $region18: #{tpu_custom_call.1} parent=1 // pred_check
      _
    $region19: #{tpu_custom_call.1} parent=1 // pred_check_branch
      %232 = sbr.rel (0) target = $region21
    $region20: #{tpu_custom_call.1} parent=1 // pred_region
      %s234 = ssub.s32 384, 384
      %235 = vsyncadd [#allocation4], %s234
      %s237 = sshll.u32 [#allocation7], 4
      %s238 = int_to_ptr.vmem [resolvable:$true] %s237
      %240 = dma.vmem_to_hbm [thread:$0]  %s238, 384, %s2, [#allocation4]
    $region21: #{tpu_custom_call.1} parent=1 // pred_fallthru
      _
    // Predicated region
    $region22: #{tpu_custom_call.1} parent=1 // pred_check
      _
    $region23: #{tpu_custom_call.1} parent=1 // pred_check_branch
      %242 = sbr.rel (0) target = $region25
    $region24: #{tpu_custom_call.1} parent=1 // pred_region
      %243 = dma.done [#allocation4], 384
    $region25: #{tpu_custom_call.1} parent=1 // pred_fallthru
      _
    %244 = vsyncpa [#allocation3], 1
    %245 = vsyncpa [#allocation6], 1
    %246 = vsyncpa [#allocation4], 1

</llo_original>
